<compile_context>
chip_gen: v7x
topology: tpu7x:2x2x1
jax: 0.10.0
libtpu: 0.0.40
codegen_flags: <defaults>
</compile_context>

<pallas_src>
import functools

import jax
import jax.numpy as jnp
import numpy as np
from jax.experimental import pallas as pl
from jax.experimental.pallas import tpu as pltpu


def _round_up(x, m):
    return ((x + m - 1) // m) * m


def _adamole_kernel(x_ref, w_ref, bg_ref, exp_ref, bcat_ref, out_ref, *,
                    num_experts, kp, gp, scaling, max_threshold, mm_dtype):
    """One row-tile of AdaMoLE.

    x_ref    : (tm, D)        activations, native dtype (cast here)
    w_ref    : (D, Kp + GP)   fused [A_concat | 0 | Wr | Wt | 0]   (mm_dtype)
    bg_ref   : (1, GP)        gating bias slab [br | bt | 0]        (f32)
    exp_ref  : (GP, Kp)       0/1 expander (expert -> its r lanes)  (f32)
    bcat_ref : (Kp, Op)       stacked LoRA-B, zero padded           (mm_dtype)
    out_ref  : (tm, Op)
    """
    E = num_experts
    tm = x_ref.shape[0]

    x = x_ref[...].astype(mm_dtype)

    # ---- single fused projection on the MXU (f32 accumulation) ----
    proj = jnp.dot(x, w_ref[...], preferred_element_type=jnp.float32)

    h = proj[:, :kp]                              # (tm, Kp) LoRA "down" acts (pad cols = 0)
    g = proj[:, kp:kp + gp] + bg_ref[...]         # (tm, GP) gating slab

    # Lane masks for the gating slab (padded lanes must not affect softmax/threshold).
    lane = jax.lax.broadcasted_iota(jnp.int32, (tm, gp), 1)
    is_router = lane < E
    is_thr = lane == E

    # ---- softmax numerator/denominator over the router lanes only ----
    g_r = jnp.where(is_router, g, jnp.float32(-1e30))
    m = jnp.max(g_r, axis=-1, keepdims=True)
    e = jnp.exp(g_r - m)                          # padded/threshold lanes underflow to 0
    se = jnp.sum(e, axis=-1, keepdims=True)       # > 0

    # ---- adaptive threshold: exact sigmoid (selection-critical) ----
    t = jnp.sum(jnp.where(is_thr, g, 0.0), axis=-1, keepdims=True)
    thr = max_threshold / (1.0 + jnp.exp(-t))     # (tm, 1)

    # Division-free selection:  gate - thr >= 0  <=>  e >= thr * se   (se > 0).
    sel = jnp.logical_and(e >= thr * se, is_router)
    num = jnp.where(sel, e - thr * se, 0.0)       # (tm, GP), >= 0

    # Mixture weights: the softmax denominator se cancels, so a single EXACT
    # normalization is enough:  w_i = scaling * num_i / sum_j num_j.
    denom = jnp.sum(num, axis=-1, keepdims=True)
    denom = jnp.where(denom == 0.0, 1.0, denom)   # all-zero selection -> zero output
    weights = num * (scaling / denom)             # (tm, GP), f32

    # ---- gate expansion as a tiny matmul (MXU slot, no lane relayout) ----
    w_exp = jnp.dot(weights, exp_ref[...], preferred_element_type=jnp.float32)  # (tm, Kp)

    # ---- expert mixture as one matmul over the stacked LoRA-B ----
    hs = (h * w_exp).astype(mm_dtype)
    out = jnp.dot(hs, bcat_ref[...], preferred_element_type=jnp.float32)
    out_ref[...] = out.astype(out_ref.dtype)


def adamole_forward(x, wr, br, wt, bt, lora_a, lora_b, *, lora_alpha,
                    tm=512, matmul_dtype=None, min_grid_steps=4):
    """x: (B, S, D) -> (B, S, O).

    wr: (D, E) router weight (transposed), br: (E,)
    wt: (D, 1) threshold weight (transposed), bt: (1,)
    lora_a: (E, D, r)   lora_b: (E, r, O)
    matmul_dtype: MXU operand dtype (bf16 is valid on v5e/v6e/v7x); gating math
                  is f32 regardless.  Default keeps x's dtype.
    """
    B, S, D = x.shape
    E, _, r = lora_a.shape
    O = lora_b.shape[-1]
    K = E * r
    Kp = _round_up(max(K, 1), 128)       # lane-aligned LoRA slab
    GP = _round_up(E + 1, 128)           # lane-aligned gating slab
    P = Kp + GP
    N = B * S
    out_dtype = x.dtype
    mm_dtype = jnp.dtype(x.dtype if matmul_dtype is None else matmul_dtype)

    # Pad the output lane dim only when it is narrower than one vreg row.
    Op = _round_up(O, 128) if O < 128 else O

    # x stays in its native dtype; no extra pad/cast pass over HBM.
    x_flat = x.reshape(N, D)

    # Fused projection weight: [A_concat | 0 | Wr | Wt | 0]  -> (D, Kp + GP)
    a_flat = jnp.transpose(lora_a, (1, 0, 2)).reshape(D, K)
    w_all = jnp.zeros((D, P), mm_dtype)
    w_all = w_all.at[:, :K].set(a_flat.astype(mm_dtype))
    w_all = w_all.at[:, Kp:Kp + E].set(wr.astype(mm_dtype))
    w_all = w_all.at[:, Kp + E:Kp + E + 1].set(wt.astype(mm_dtype))

    # Gating bias slab (padded lanes masked in-kernel, so zero bias is fine).
    b_gate = jnp.zeros((1, GP), jnp.float32)
    b_gate = b_gate.at[0, :E].set(br.astype(jnp.float32))
    b_gate = b_gate.at[0, E:E + 1].set(bt.astype(jnp.float32))

    # 0/1 expander: expert e -> its r lanes of the Kp slab.
    expander_np = np.zeros((GP, Kp), np.float32)
    for ei in range(E):
        expander_np[ei, ei * r:(ei + 1) * r] = 1.0
    expander = jnp.asarray(expander_np)

    # Stacked LoRA-B, zero padded to (Kp, Op).
    b_cat = jnp.zeros((Kp, Op), mm_dtype)
    b_cat = b_cat.at[:K, :O].set(lora_b.reshape(K, O).astype(mm_dtype))

    # --- row tile: big enough to amortize grid overhead, small enough that the
    # grid has >= min_grid_steps steps (v7x dual-TC + DMA pipelining). ---
    tm = max(8, (int(tm) // 8) * 8)
    tm = min(tm, max(8, _round_up(pl.cdiv(N, min_grid_steps), 8)))

    # --- VMEM budget per generation (3/4 of capacity: ~48 MiB v7x, ~96 MiB v5e/v6e). ---
    try:
        vmem_cap = int(pltpu.get_tpu_info().vmem_capacity_bytes)
    except Exception:
        vmem_cap = 64 << 20          # conservative fallback (v7x per-core size)
    vmem_usable = (vmem_cap * 3) // 4

    x_item = jnp.dtype(x.dtype).itemsize
    out_item = jnp.dtype(out_dtype).itemsize
    mm_item = mm_dtype.itemsize

    def vmem_est(t):
        tiles = 2 * t * D * x_item + 2 * t * Op * out_item            # double-buffered I/O
        weights = 2 * (D * P * mm_item + Kp * Op * mm_item
                       + GP * 4 + GP * Kp * 4)                         # resident operands
        interm = 4 * t * P * 4                                         # f32 intermediates
        return tiles + weights + interm + (4 << 20)

    while tm > 64 and vmem_est(tm) > vmem_usable:
        tm //= 2
    vmem_limit = int(min(max(vmem_est(tm), 32 << 20), vmem_usable))

    kernel = functools.partial(
        _adamole_kernel,
        num_experts=E, kp=Kp, gp=GP,
        scaling=float(lora_alpha) / float(r),
        max_threshold=1.0 / float(E),
        mm_dtype=mm_dtype,
    )

    out_flat = pl.pallas_call(
        kernel,
        out_shape=jax.ShapeDtypeStruct((N, Op), out_dtype),
        grid_spec=pltpu.PrefetchScalarGridSpec(
            num_scalar_prefetch=0,
            grid=(pl.cdiv(N, tm),),
            in_specs=[
                pl.BlockSpec((tm, D), lambda i: (i, 0)),     # x tile (native dtype)
                pl.BlockSpec((D, P), lambda i: (0, 0)),      # fused [A|Wr|Wt] (resident)
                pl.BlockSpec((1, GP), lambda i: (0, 0)),     # gating bias slab
                pl.BlockSpec((GP, Kp), lambda i: (0, 0)),    # 0/1 expander
                pl.BlockSpec((Kp, Op), lambda i: (0, 0)),    # stacked LoRA-B
            ],
            out_specs=pl.BlockSpec((tm, Op), lambda i: (i, 0)),
        ),
        compiler_params=pltpu.CompilerParams(
            dimension_semantics=("parallel",),
            vmem_limit_bytes=vmem_limit,
        ),
    )(x_flat, w_all, b_gate, expander, b_cat)

    out_flat = out_flat[:, :O] if Op != O else out_flat
    return out_flat.reshape(B, S, O)


def adamole_reference(x, wr, br, wt, bt, lora_a, lora_b, *, lora_alpha):
    """Pure-JAX reference mirroring the PyTorch forward (eval, noisy=False)."""
    B, S, D = x.shape
    E, _, r = lora_a.shape
    scaling = lora_alpha / r
    xf = x.reshape(-1, D).astype(jnp.float32)
    logits = xf @ wr + br.reshape(1, -1)
    gate = jax.nn.softmax(logits, axis=-1)
    thr = jax.nn.sigmoid(xf @ wt + bt.reshape(1, 1)) * (1.0 / E)
    adapted = gate - thr
    sel = (adapted >= 0).astype(jnp.float32)
    w = adapted * sel
    ws = jnp.sum(w, axis=-1, keepdims=True)
    ws = jnp.where(ws == 0, jnp.ones_like(ws), ws)
    w = w / ws
    out = jnp.zeros((xf.shape[0], lora_b.shape[-1]), jnp.float32)
    for ei in range(E):
        y = (xf @ lora_a[ei]) @ lora_b[ei] * scaling
        out = out + w[:, ei:ei + 1] * y
    return out.reshape(B, S, -1).astype(x.dtype)


if __name__ == "__main__":
    # Small deterministic config consistent with the module:
    #   input_dim=32, output_dim=32, lora_r=4, num_experts=4, lora_alpha=8
    B, S, D, O, E, r = 2, 8, 32, 32, 4, 4
    lora_alpha = 8.0

    key = jax.random.PRNGKey(0)
    kx, kwr, kbr, kwt, kbt, ka, kb = jax.random.split(key, 7)

    x = jax.random.normal(kx, (B, S, D), jnp.float32)
    # nn.Linear weights, stored transposed as (in, out):
    wr = jax.random.normal(kwr, (D, E), jnp.float32) * 0.1        # router.weight.T
    br = jax.random.normal(kbr, (E,), jnp.float32) * 0.1          # router.bias
    wt = jax.random.normal(kwt, (D, 1), jnp.float32) * 0.1        # threshold_fn.weight.T
    bt = jax.random.normal(kbt, (1,), jnp.float32) * 0.1          # threshold_fn.bias
    lora_a = jax.random.normal(ka, (E, D, r), jnp.float32) * 0.1  # per-expert lora_A.weight.T
    # NOTE: the PyTorch module zero-inits lora_B (forward would be all-zero);
    # small random values so the kernel compute is exercised.
    lora_b = jax.random.normal(kb, (E, r, O), jnp.float32) * 0.1  # per-expert lora_B.weight.T

    # f32 MXU path (selection-parity path; normalization is exact division).
    out = adamole_forward(x, wr, br, wt, bt, lora_a, lora_b, lora_alpha=lora_alpha)
    jax.block_until_ready(out)
    ref = adamole_reference(x, wr, br, wt, bt, lora_a, lora_b, lora_alpha=lora_alpha)
    np.testing.assert_allclose(np.asarray(out), np.asarray(ref),
                               rtol=2e-2, atol=1e-3)

    # bf16 MXU-operand path (valid on v5e/v6e/v7x).  No tight assert: bf16
    # router/threshold weights can legitimately flip expert selection for tokens
    # sitting exactly on the threshold boundary.
    out_bf16 = adamole_forward(x, wr, br, wt, bt, lora_a, lora_b,
                               lora_alpha=lora_alpha, matmul_dtype=jnp.bfloat16)
    jax.block_until_ready(out_bf16)
    assert np.all(np.isfinite(np.asarray(out_bf16, dtype=np.float32)))

    print("KERNEL_OK")
</pallas_src>

<mosaic_0001>
module attributes {stable_mosaic.version = 11 : i64} {
  func.func @_adamole_kernel(%arg0: i32, %arg1: memref<8x32xf32, #tpu.memory_space<vmem>>, %arg2: memref<32x256xf32, #tpu.memory_space<vmem>>, %arg3: memref<1x128xf32, #tpu.memory_space<vmem>>, %arg4: memref<128x128xf32, #tpu.memory_space<vmem>>, %arg5: memref<128x128xf32, #tpu.memory_space<vmem>>, %arg6: memref<8x128xf32, #tpu.memory_space<vmem>>) attributes {dimension_semantics = [#tpu.dimension_semantics<parallel>], iteration_bounds = array<i64: 2>, scalar_prefetch = 0 : i64, scratch_operands = 0 : i64, tpu.core_type = #tpu.core_type<tc>, window_params = [{transform_indices = @transform_0, window_bounds = array<i64: 8, 32>}, {pipeline_mode = #tpu.pipeline_mode<synchronous>, transform_indices = @transform_1, window_bounds = array<i64: 32, 256>}, {pipeline_mode = #tpu.pipeline_mode<synchronous>, transform_indices = @transform_2, window_bounds = array<i64: 1, 128>}, {pipeline_mode = #tpu.pipeline_mode<synchronous>, transform_indices = @transform_3, window_bounds = array<i64: 128, 128>}, {pipeline_mode = #tpu.pipeline_mode<synchronous>, transform_indices = @transform_4, window_bounds = array<i64: 128, 128>}, {transform_indices = @transform_5, window_bounds = array<i64: 8, 128>}]} {
    %c0 = arith.constant 0 : index
    %c0_0 = arith.constant 0 : index
    %0 = vector.load %arg1[%c0, %c0_0] : memref<8x32xf32, #tpu.memory_space<vmem>>, vector<8x32xf32>
    %c0_1 = arith.constant 0 : index
    %c0_2 = arith.constant 0 : index
    %1 = vector.load %arg2[%c0_1, %c0_2] : memref<32x256xf32, #tpu.memory_space<vmem>>, vector<32x256xf32>
    %cst = arith.constant dense<0.000000e+00> : vector<8x256xf32>
    %2 = tpu.matmul %0, %1, %cst {dimension_numbers = #tpu.dot_dimension_numbers<[1], [0], [0], [1], [0, 0, 1, 1], [], []>} : vector<8x32xf32>, vector<32x256xf32>, vector<8x256xf32> -> vector<8x256xf32>
    %3 = vector.extract_strided_slice %2 {offsets = [0, 0], sizes = [8, 128], strides = [1, 1]} : vector<8x256xf32> to vector<8x128xf32>
    %4 = vector.extract_strided_slice %2 {offsets = [0, 128], sizes = [8, 128], strides = [1, 1]} : vector<8x256xf32> to vector<8x128xf32>
    %c0_3 = arith.constant 0 : index
    %c0_4 = arith.constant 0 : index
    %5 = vector.load %arg3[%c0_3, %c0_4] : memref<1x128xf32, #tpu.memory_space<vmem>>, vector<1x128xf32>
    %6 = vector.broadcast %5 : vector<1x128xf32> to vector<8x128xf32>
    %7 = arith.addf %4, %6 : vector<8x128xf32>
    %8 = tpu.iota {dimensions = array<i32: 1>} : vector<8x128xi32>
    %c4_i32 = arith.constant 4 : i32
    %9 = vector.broadcast %c4_i32 : i32 to vector<8x128xi32>
    %10 = arith.cmpi slt, %8, %9 : vector<8x128xi32>
    %c4_i32_5 = arith.constant 4 : i32
    %11 = vector.broadcast %c4_i32_5 : i32 to vector<8x128xi32>
    %12 = arith.cmpi eq, %8, %11 : vector<8x128xi32>
    %cst_6 = arith.constant -1.000000e+30 : f32
    %13 = vector.broadcast %cst_6 : f32 to vector<8x128xf32>
    %14 = arith.select %10, %7, %13 : vector<8x128xi1>, vector<8x128xf32>
    %cst_7 = arith.constant dense<0xFF800000> : vector<8xf32>
    %15 = vector.multi_reduction <maximumf>, %14, %cst_7 [1] : vector<8x128xf32> to vector<8xf32>
    %16 = vector.shape_cast %15 : vector<8xf32> to vector<8x1xf32>
    %17 = vector.broadcast %16 : vector<8x1xf32> to vector<8x128xf32>
    %18 = arith.subf %14, %17 : vector<8x128xf32>
    %19 = math.exp %18 : vector<8x128xf32>
    %cst_8 = arith.constant dense<0.000000e+00> : vector<8xf32>
    %20 = vector.multi_reduction <add>, %19, %cst_8 [1] : vector<8x128xf32> to vector<8xf32>
    %21 = vector.shape_cast %20 : vector<8xf32> to vector<8x1xf32>
    %cst_9 = arith.constant 0.000000e+00 : f32
    %22 = vector.broadcast %cst_9 : f32 to vector<8x128xf32>
    %23 = arith.select %12, %7, %22 : vector<8x128xi1>, vector<8x128xf32>
    %cst_10 = arith.constant dense<0.000000e+00> : vector<8xf32>
    %24 = vector.multi_reduction <add>, %23, %cst_10 [1] : vector<8x128xf32> to vector<8xf32>
    %25 = vector.shape_cast %24 : vector<8xf32> to vector<8x1xf32>
    %cst_11 = arith.constant 0.000000e+00 : f32
    %26 = vector.broadcast %cst_11 : f32 to vector<8x1xf32>
    %27 = arith.subf %26, %25 : vector<8x1xf32>
    %28 = math.exp %27 : vector<8x1xf32>
    %cst_12 = arith.constant 1.000000e+00 : f32
    %29 = vector.broadcast %cst_12 : f32 to vector<8x1xf32>
    %30 = arith.addf %29, %28 : vector<8x1xf32>
    %cst_13 = arith.constant 2.500000e-01 : f32
    %31 = vector.broadcast %cst_13 : f32 to vector<8x1xf32>
    %32 = arith.divf %31, %30 : vector<8x1xf32>
    %33 = arith.mulf %32, %21 : vector<8x1xf32>
    %34 = vector.broadcast %33 : vector<8x1xf32> to vector<8x128xf32>
    %35 = arith.cmpf oge, %19, %34 : vector<8x128xf32>
    %36 = arith.andi %35, %10 : vector<8x128xi1>
    %37 = arith.mulf %32, %21 : vector<8x1xf32>
    %38 = vector.broadcast %37 : vector<8x1xf32> to vector<8x128xf32>
    %39 = arith.subf %19, %38 : vector<8x128xf32>
    %cst_14 = arith.constant 0.000000e+00 : f32
    %40 = vector.broadcast %cst_14 : f32 to vector<8x128xf32>
    %41 = arith.select %36, %39, %40 : vector<8x128xi1>, vector<8x128xf32>
    %cst_15 = arith.constant dense<0.000000e+00> : vector<8xf32>
    %42 = vector.multi_reduction <add>, %41, %cst_15 [1] : vector<8x128xf32> to vector<8xf32>
    %43 = vector.shape_cast %42 : vector<8xf32> to vector<8x1xf32>
    %cst_16 = arith.constant 0.000000e+00 : f32
    %44 = vector.broadcast %cst_16 : f32 to vector<8x1xf32>
    %45 = arith.cmpf oeq, %43, %44 : vector<8x1xf32>
    %cst_17 = arith.constant 1.000000e+00 : f32
    %46 = vector.broadcast %cst_17 : f32 to vector<8x1xf32>
    %47 = arith.select %45, %46, %43 : vector<8x1xi1>, vector<8x1xf32>
    %cst_18 = arith.constant 2.000000e+00 : f32
    %48 = vector.broadcast %cst_18 : f32 to vector<8x1xf32>
    %49 = arith.divf %48, %47 : vector<8x1xf32>
    %50 = vector.broadcast %49 : vector<8x1xf32> to vector<8x128xf32>
    %51 = arith.mulf %41, %50 : vector<8x128xf32>
    %c0_19 = arith.constant 0 : index
    %c0_20 = arith.constant 0 : index
    %52 = vector.load %arg4[%c0_19, %c0_20] : memref<128x128xf32, #tpu.memory_space<vmem>>, vector<128x128xf32>
    %cst_21 = arith.constant dense<0.000000e+00> : vector<8x128xf32>
    %53 = tpu.matmul %51, %52, %cst_21 {dimension_numbers = #tpu.dot_dimension_numbers<[1], [0], [0], [1], [0, 0, 1, 1], [], []>} : vector<8x128xf32>, vector<128x128xf32>, vector<8x128xf32> -> vector<8x128xf32>
    %54 = arith.mulf %3, %53 : vector<8x128xf32>
    %c0_22 = arith.constant 0 : index
    %c0_23 = arith.constant 0 : index
    %55 = vector.load %arg5[%c0_22, %c0_23] : memref<128x128xf32, #tpu.memory_space<vmem>>, vector<128x128xf32>
    %cst_24 = arith.constant dense<0.000000e+00> : vector<8x128xf32>
    %56 = tpu.matmul %54, %55, %cst_24 {dimension_numbers = #tpu.dot_dimension_numbers<[1], [0], [0], [1], [0, 0, 1, 1], [], []>} : vector<8x128xf32>, vector<128x128xf32>, vector<8x128xf32> -> vector<8x128xf32>
    %c0_25 = arith.constant 0 : index
    %c0_26 = arith.constant 0 : index
    %57 = vector.load %arg6[%c0_25, %c0_26] : memref<8x128xf32, #tpu.memory_space<vmem>>, vector<8x128xf32>
    tpu.vector_store %arg6[%c0_25, %c0_26], %56 {strides = array<i32>} : memref<8x128xf32, #tpu.memory_space<vmem>>, vector<8x128xf32>,
    return
  }
  func.func @transform_0(%arg0: i32) -> (i32, i32) {
    %c0_i32 = arith.constant 0 : i32
    %c0_i32_0 = arith.constant 0 : i32
    return %arg0, %c0_i32 : i32, i32
  }
  func.func @transform_1(%arg0: i32) -> (i32, i32) {
    %c0_i32 = arith.constant 0 : i32
    %c0_i32_0 = arith.constant 0 : i32
    %c0_i32_1 = arith.constant 0 : i32
    return %c0_i32, %c0_i32_0 : i32, i32
  }
  func.func @transform_2(%arg0: i32) -> (i32, i32) {
    %c0_i32 = arith.constant 0 : i32
    %c0_i32_0 = arith.constant 0 : i32
    %c0_i32_1 = arith.constant 0 : i32
    return %c0_i32, %c0_i32_0 : i32, i32
  }
  func.func @transform_3(%arg0: i32) -> (i32, i32) {
    %c0_i32 = arith.constant 0 : i32
    %c0_i32_0 = arith.constant 0 : i32
    %c0_i32_1 = arith.constant 0 : i32
    return %c0_i32, %c0_i32_0 : i32, i32
  }
  func.func @transform_4(%arg0: i32) -> (i32, i32) {
    %c0_i32 = arith.constant 0 : i32
    %c0_i32_0 = arith.constant 0 : i32
    %c0_i32_1 = arith.constant 0 : i32
    return %c0_i32, %c0_i32_0 : i32, i32
  }
  func.func @transform_5(%arg0: i32) -> (i32, i32) {
    %c0_i32 = arith.constant 0 : i32
    %c0_i32_0 = arith.constant 0 : i32
    return %arg0, %c0_i32 : i32, i32
  }
}

</mosaic_0001>

<llo_original>
// kernel: tpu_custom_call.1
$region0: #{tpu_custom_call.1}
  #allocation0 [shape = 'u32[]', space=smem, size = 0x4, offset = 0x4, fixed_abs, tag = 'smem constant byte address 0x4 - core index']
  #allocation1 [shape = 'u32[144,128]{1,0:T(1,128)}', space=vmem, size = 0x12000, scoped, tag = 'internal scratch']
  %s0 = inlined_call_operand.hbm [shape: f32[16,32], index: 0, kind: input, shape index: {}]
  %s1 = inlined_call_operand.hbm [shape: f32[32,256], index: 1, kind: input, shape index: {}]
  %s2 = inlined_call_operand.vmem [shape: f32[1,128], index: 2, kind: input, shape index: {}]
  %s3 = inlined_call_operand.hbm [shape: f32[128,128], index: 3, kind: input, shape index: {}]
  %s4 = inlined_call_operand.hbm [shape: f32[128,128], index: 4, kind: input, shape index: {}]
  %s5 = inlined_call_operand.hbm [shape: f32[16,128], index: 5, kind: output, shape index: {}]
  %s6 = sld [smem:[#allocation0]]
  $region69: #{tpu_custom_call.1} parent=0
    _
  %s8 = ssub.s32 1, %s6
  %s9 = scalar_select 0, %s8, %s6
  $region1: #{tpu_custom_call.1} parent=0
    #allocation2 [shape = 'u8[8192]{0}', space=vmem, size = 0x2000, scoped, tag = 'input window, operand 0']
    #allocation3 [shape = 's32[2]{0}', space=sflag, size = 0x8, scoped, tag = 'scoped memory for tpu_custom_call.1']
    #allocation4 [shape = 's32[2]{0}', space=sflag, size = 0x8, scoped, tag = 'scoped memory for tpu_custom_call.1']
    #allocation5 [shape = 'u8[32768]{0}', space=vmem, size = 0x8000, scoped, tag = 'input window, operand 1, single buffered']
    #allocation6 [shape = 's32[1]{0}', space=sflag, size = 0x4, scoped, tag = 'scoped memory for tpu_custom_call.1']
    #allocation7 [shape = 'u8[65536]{0}', space=vmem, size = 0x10000, scoped, tag = 'input window, operand 3, single buffered']
    #allocation8 [shape = 'u8[65536]{0}', space=vmem, size = 0x10000, scoped, tag = 'input window, operand 4, single buffered']
    #allocation9 [shape = 's32[1]{0}', space=sflag, size = 0x4, scoped, tag = 'scoped memory for tpu_custom_call.1']
    #allocation10 [shape = 'u8[8192]{0}', space=vmem, size = 0x2000, scoped, tag = 'output window, operand 0']
    %10 = vsyncpa [#allocation3], 0
    %s11 = scalar_lea.sflag [#allocation3], 1
    %12 = vsyncpa %s11, 0
    %13 = vsyncpa [#allocation6], 0
    %14 = vsyncpa [#allocation9], 0
    %15 = vsyncpa [#allocation4], 0
    %s16 = scalar_lea.sflag [#allocation4], 1
    %17 = vsyncpa %s16, 0
    loop: start=0, step=1, limit=4
    $region2: #{tpu_custom_call.1} parent=1 // loop_pre_header
      _
    $region3: #{tpu_custom_call.1} parent=1 // loop_header
      %s19 = sphi 0, %s23
      %p20 = scmp.ge.s32.totalorder %s19, 4
      %s29 = sphi 0, %s31
      %s32 = sphi 0, %s29
      %s33 = sphi 0, %s32
      %s49 = sphi 0, %s33
      %s53 = sphi 0, %s53
      %s55 = sphi 0, %s53
      %s56 = sphi 0, %s55
      %s70 = sphi 0, %s56
      %s74 = sphi 0, %s74
      %s76 = sphi 0, %s74
      %s77 = sphi 0, %s76
      %s91 = sphi 0, %s77
      %s95 = sphi 0, %s95
      %s97 = sphi 0, %s95
      %s98 = sphi 0, %s97
      %s112 = sphi 0, %s98
      %s116 = sphi 0, %s116
      %s118 = sphi 0, %s116
      %s119 = sphi 0, %s118
      %s133 = sphi 0, %s119
      %s139 = sphi 0, %s141
      %s142 = sphi 0, %s139
      %s143 = sphi 0, %s142
      %s159 = sphi 0, %s143
    $region4: #{tpu_custom_call.1} parent=1 // loop_header_branch
      %22 = sbr.rel (%p20) target = $region8
    $region5: #{tpu_custom_call.1} parent=1 // loop_body
      %s24 = ssub.s32 %s19, 1
      %s25 = ssub.s32 %s19, 2
      %s26 = sadd.s32 %s19, 1
      %s27 = ssub.s32 %s19, %s26
      %p28 = scmp.eq.s32.totalorder %s27, 0
      %s30 = sadd.s32 %s29, 1
      %s31 = scalar_select %p28, %s29, %s30
      %p34 = pneg %p28
      %p35 = scmp.eq.s32.totalorder %s19, 1
      %p36 = por %p34, %p35
      %p37 = scmp.ne.s32.totalorder %s29, %s32
      %p38 = scmp.eq.s32.totalorder %s19, 0
      %p39 = por %p37, %p38
      %p40 = scmp.ne.s32.totalorder %s29, %s32
      %p41 = scmp.eq.s32.totalorder %s24, 1
      %p42 = por %p40, %p41
      %p43 = scmp.ne.s32.totalorder %s32, %s33
      %p44 = scmp.eq.s32.totalorder %s24, 0
      %p45 = por %p43, %p44
      %p46 = scmp.ne.s32.totalorder %s32, %s33
      %p47 = scmp.eq.s32.totalorder %s25, 1
      %p48 = por %p46, %p47
      %p50 = scmp.ne.s32.totalorder %s33, %s49
      %p51 = scmp.eq.s32.totalorder %s25, 0
      %p52 = por %p50, %p51
      %s54 = sadd.s32 %s53, 1
      %p57 = scmp.eq.s32.totalorder %s19, 1
      %p58 = scmp.ne.s32.totalorder %s53, %s55
      %p59 = scmp.eq.s32.totalorder %s19, 0
      %p60 = por %p58, %p59
      %p61 = scmp.ne.s32.totalorder %s53, %s55
      %p62 = scmp.eq.s32.totalorder %s24, 1
      %p63 = por %p61, %p62
      %p64 = scmp.ne.s32.totalorder %s55, %s56
      %p65 = scmp.eq.s32.totalorder %s24, 0
      %p66 = por %p64, %p65
      %p67 = scmp.ne.s32.totalorder %s55, %s56
      %p68 = scmp.eq.s32.totalorder %s25, 1
      %p69 = por %p67, %p68
      %p71 = scmp.ne.s32.totalorder %s56, %s70
      %p72 = scmp.eq.s32.totalorder %s25, 0
      %p73 = por %p71, %p72
      %s75 = sadd.s32 %s74, 1
      %p78 = scmp.eq.s32.totalorder %s19, 1
      %p79 = scmp.ne.s32.totalorder %s74, %s76
      %p80 = scmp.eq.s32.totalorder %s19, 0
      %p81 = por %p79, %p80
      %p82 = scmp.ne.s32.totalorder %s74, %s76
      %p83 = scmp.eq.s32.totalorder %s24, 1
      %p84 = por %p82, %p83
      %p85 = scmp.ne.s32.totalorder %s76, %s77
      %p86 = scmp.eq.s32.totalorder %s24, 0
      %p87 = por %p85, %p86
      %p88 = scmp.ne.s32.totalorder %s76, %s77
      %p89 = scmp.eq.s32.totalorder %s25, 1
      %p90 = por %p88, %p89
      %p92 = scmp.ne.s32.totalorder %s77, %s91
      %p93 = scmp.eq.s32.totalorder %s25, 0
      %p94 = por %p92, %p93
      %s96 = sadd.s32 %s95, 1
      %p99 = scmp.eq.s32.totalorder %s19, 1
      %p100 = scmp.ne.s32.totalorder %s95, %s97
      %p101 = scmp.eq.s32.totalorder %s19, 0
      %p102 = por %p100, %p101
      %p103 = scmp.ne.s32.totalorder %s95, %s97
      %p104 = scmp.eq.s32.totalorder %s24, 1
      %p105 = por %p103, %p104
      %p106 = scmp.ne.s32.totalorder %s97, %s98
      %p107 = scmp.eq.s32.totalorder %s24, 0
      %p108 = por %p106, %p107
      %p109 = scmp.ne.s32.totalorder %s97, %s98
      %p110 = scmp.eq.s32.totalorder %s25, 1
      %p111 = por %p109, %p110
      %p113 = scmp.ne.s32.totalorder %s98, %s112
      %p114 = scmp.eq.s32.totalorder %s25, 0
      %p115 = por %p113, %p114
      %s117 = sadd.s32 %s116, 1
      %p120 = scmp.eq.s32.totalorder %s19, 1
      %p121 = scmp.ne.s32.totalorder %s116, %s118
      %p122 = scmp.eq.s32.totalorder %s19, 0
      %p123 = por %p121, %p122
      %p124 = scmp.ne.s32.totalorder %s116, %s118
      %p125 = scmp.eq.s32.totalorder %s24, 1
      %p126 = por %p124, %p125
      %p127 = scmp.ne.s32.totalorder %s118, %s119
      %p128 = scmp.eq.s32.totalorder %s24, 0
      %p129 = por %p127, %p128
      %p130 = scmp.ne.s32.totalorder %s118, %s119
      %p131 = scmp.eq.s32.totalorder %s25, 1
      %p132 = por %p130, %p131
      %p134 = scmp.ne.s32.totalorder %s119, %s133
      %p135 = scmp.eq.s32.totalorder %s25, 0
      %p136 = por %p134, %p135
      %s137 = ssub.s32 %s19, %s26
      %p138 = scmp.eq.s32.totalorder %s137, 0
      %s140 = sadd.s32 %s139, 1
      %s141 = scalar_select %p138, %s139, %s140
      %p144 = pneg %p138
      %p145 = scmp.eq.s32.totalorder %s19, 1
      %p146 = por %p144, %p145
      %p147 = scmp.ne.s32.totalorder %s139, %s142
      %p148 = scmp.eq.s32.totalorder %s19, 0
      %p149 = por %p147, %p148
      %p150 = scmp.ne.s32.totalorder %s139, %s142
      %p151 = scmp.eq.s32.totalorder %s24, 1
      %p152 = por %p150, %p151
      %p153 = scmp.ne.s32.totalorder %s142, %s143
      %p154 = scmp.eq.s32.totalorder %s24, 0
      %p155 = por %p153, %p154
      %p156 = scmp.ne.s32.totalorder %s142, %s143
      %p157 = scmp.eq.s32.totalorder %s25, 1
      %p158 = por %p156, %p157
      %p160 = scmp.ne.s32.totalorder %s143, %s159
      %p161 = scmp.eq.s32.totalorder %s25, 0
      %p162 = por %p160, %p161
      %p163 = scmp.le.s32.totalorder 1, %s19
      %p164 = scmp.lt.s32.totalorder %s19, 3
      %p165 = pnand %p163, %p164
      %p166 = pneg %p165
      // Predicated region
      $region9: #{tpu_custom_call.1} parent=5 // pred_check
        _
      $region10: #{tpu_custom_call.1} parent=5 // pred_check_branch
        %168 = sbr.rel (%p165) target = $region12
      $region11: #{tpu_custom_call.1} parent=5 // pred_region
        %s169 = ssub.s32 %s19, 1
        // Predicated region
        $region13: #{tpu_custom_call.1} parent=11 // pred_check
          %p170 = pneg %p66
        $region14: #{tpu_custom_call.1} parent=11 // pred_check_branch
          %172 = sbr.rel (%p170) target = $region16
        $region15: #{tpu_custom_call.1} parent=11 // pred_region
          %s174 = ssub.s32 1024, 1024
          %175 = vsyncadd [#allocation6], %s174
          %s176 = sshll.u32 [#allocation5], 4
          %s177 = int_to_ptr.vmem [resolvable:$true] %s176
          %182 = dma.hbm_to_vmem [thread:$0]  %s1, 1024, %s177, [#allocation6], 256, 256, 16
        $region16: #{tpu_custom_call.1} parent=11 // pred_fallthru
          _
        // Predicated region
        $region17: #{tpu_custom_call.1} parent=11 // pred_check
          %p183 = pneg %p87
        $region18: #{tpu_custom_call.1} parent=11 // pred_check_branch
          %185 = sbr.rel (%p183) target = $region20
        $region19: #{tpu_custom_call.1} parent=11 // pred_region
          _
        $region20: #{tpu_custom_call.1} parent=11 // pred_fallthru
          _
        // Predicated region
        $region21: #{tpu_custom_call.1} parent=11 // pred_check
          %p186 = pneg %p108
        $region22: #{tpu_custom_call.1} parent=11 // pred_check_branch
          %188 = sbr.rel (%p186) target = $region24
        $region23: #{tpu_custom_call.1} parent=11 // pred_region
          %s190 = ssub.s32 2048, 2048
          %191 = vsyncadd [#allocation6], %s190
          %s192 = sshll.u32 [#allocation7], 4
          %s193 = int_to_ptr.vmem [resolvable:$true] %s192
          %198 = dma.hbm_to_vmem [thread:$0]  %s3, 2048, %s193, [#allocation6], 128, 128, 8
        $region24: #{tpu_custom_call.1} parent=11 // pred_fallthru
          _
        // Predicated region
        $region25: #{tpu_custom_call.1} parent=11 // pred_check
          %p199 = pneg %p129
        $region26: #{tpu_custom_call.1} parent=11 // pred_check_branch
          %201 = sbr.rel (%p199) target = $region28
        $region27: #{tpu_custom_call.1} parent=11 // pred_region
          %s203 = ssub.s32 2048, 2048
          %204 = vsyncadd [#allocation9], %s203
          %s205 = sshll.u32 [#allocation8], 4
          %s206 = int_to_ptr.vmem [resolvable:$true] %s205
          %211 = dma.hbm_to_vmem [thread:$0]  %s4, 2048, %s206, [#allocation9], 128, 128, 8
        $region28: #{tpu_custom_call.1} parent=11 // pred_fallthru
          _
      $region12: #{tpu_custom_call.1} parent=5 // pred_fallthru
        _
      %p212 = scmp.lt.s32.totalorder %s19, 2
      // Predicated region
      $region29: #{tpu_custom_call.1} parent=5 // pred_check
        %p213 = pneg %p212
      $region30: #{tpu_custom_call.1} parent=5 // pred_check_branch
        %215 = sbr.rel (%p213) target = $region32
      $region31: #{tpu_custom_call.1} parent=5 // pred_region
        // Predicated region
        $region33: #{tpu_custom_call.1} parent=31 // pred_check
          %p216 = pneg %p39
        $region34: #{tpu_custom_call.1} parent=31 // pred_check_branch
          %218 = sbr.rel (%p216) target = $region36
        $region35: #{tpu_custom_call.1} parent=31 // pred_region
          %s219 = sand.u32 %s29, 1
          %s220 = scalar_lea.sflag [#allocation3], %s219
          %s221 = sand.u32 %s29, 1
          %s222 = smul.addr %s221, 8
          %s223 = scalar_lea.vmem [#allocation2], %s222
          %s225 = ssub.s32 128, 128
          %226 = vsyncadd %s220, %s225
          %s227 = smul.addr %s19, 128
          %s228 = scalar_lea.hbm %s0, %s227
          %s230 = sshll.u32 %s223, 4
          %s231 = int_to_ptr.vmem [resolvable:$true] %s230
          %233 = dma.hbm_to_vmem [thread:$0]  %s228, 128, %s231, %s220
        $region36: #{tpu_custom_call.1} parent=31 // pred_fallthru
          _
      $region32: #{tpu_custom_call.1} parent=5 // pred_fallthru
        _
      %p234 = scmp.le.s32.totalorder 1, %s19
      %p235 = scmp.lt.s32.totalorder %s19, 3
      %p236 = pnand %p234, %p235
      %p237 = pneg %p236
      // Predicated region
      $region37: #{tpu_custom_call.1} parent=5 // pred_check
        _
      $region38: #{tpu_custom_call.1} parent=5 // pred_check_branch
        %239 = sbr.rel (%p236) target = $region40
      $region39: #{tpu_custom_call.1} parent=5 // pred_region
        %s240 = ssub.s32 %s19, 1
        %s241 = sand.u32 %s32, 1
        %s242 = scalar_lea.sflag [#allocation3], %s241
        %s243 = sand.u32 %s32, 1
        %s244 = smul.addr %s243, 8
        %s245 = scalar_lea.vmem [#allocation2], %s244
        // Predicated region
        $region41: #{tpu_custom_call.1} parent=39 // pred_check
          %p246 = pneg %p45
        $region42: #{tpu_custom_call.1} parent=39 // pred_check_branch
          %248 = sbr.rel (%p246) target = $region44
        $region43: #{tpu_custom_call.1} parent=39 // pred_region
          %249 = dma.done %s242, 128
        $region44: #{tpu_custom_call.1} parent=39 // pred_fallthru
          _
        // Predicated region
        $region45: #{tpu_custom_call.1} parent=39 // pred_check
          %p250 = pneg %p66
        $region46: #{tpu_custom_call.1} parent=39 // pred_check_branch
          %252 = sbr.rel (%p250) target = $region48
        $region47: #{tpu_custom_call.1} parent=39 // pred_region
          %253 = dma.done [#allocation6], 1024
        $region48: #{tpu_custom_call.1} parent=39 // pred_fallthru
          _
        // Predicated region
        $region49: #{tpu_custom_call.1} parent=39 // pred_check
          %p254 = pneg %p108
        $region50: #{tpu_custom_call.1} parent=39 // pred_check_branch
          %256 = sbr.rel (%p254) target = $region52
        $region51: #{tpu_custom_call.1} parent=39 // pred_region
          %257 = dma.done [#allocation6], 2048
        $region52: #{tpu_custom_call.1} parent=39 // pred_fallthru
          _
        // Predicated region
        $region53: #{tpu_custom_call.1} parent=39 // pred_check
          %p258 = pneg %p129
        $region54: #{tpu_custom_call.1} parent=39 // pred_check_branch
          %260 = sbr.rel (%p258) target = $region56
        $region55: #{tpu_custom_call.1} parent=39 // pred_region
          %261 = dma.done [#allocation9], 2048
        $region56: #{tpu_custom_call.1} parent=39 // pred_fallthru
          _
        %s262 = sand.u32 %s32, 1
        %s263 = scalar_lea.sflag [#allocation3], %s262
        %s264 = sand.u32 %s32, 1
        %s265 = smul.addr %s264, 8
        %s266 = scalar_lea.vmem [#allocation2], %s265
        %p267 = pneg %p45
        %p268 = pneg %p42
        %p269 = pneg %p66
        %p270 = pneg %p63
        %p271 = pneg %p87
        %p272 = pneg %p84
        %p273 = pneg %p108
        %p274 = pneg %p105
        %p275 = pneg %p129
        %p276 = pneg %p126
        %p277 = pneg %p155
        %p278 = pneg %p152
        %s279 = sand.u32 %s142, 1
        %s280 = scalar_lea.sflag [#allocation4], %s279
        %s281 = sand.u32 %s142, 1
        %s282 = smul.addr %s281, 8
        %s283 = scalar_lea.vmem [#allocation10], %s282
        %v284 = vld [vmem:[%s245] sm:$0xff]
        %v285 = vld [vmem:[#allocation5] sm:$0xff]
        %v286 = vld [vmem:[#allocation5 + $0x8] sm:$0xff]
        %v287 = vld [vmem:[#allocation5 + $0x10] sm:$0xff]
        %v288 = vld [vmem:[#allocation5 + $0x18] sm:$0xff]
        %v289 = vld [vmem:[#allocation5 + $0x20] sm:$0xff]
        %v290 = vld [vmem:[#allocation5 + $0x28] sm:$0xff]
        %v291 = vld [vmem:[#allocation5 + $0x30] sm:$0xff]
        %v292 = vld [vmem:[#allocation5 + $0x38] sm:$0xff]
        %vm293 = vcmask 261120
        %v295 = vsel %vm293, %v284, 0
        %297 = vmatprep.subr.mxu0 %v286
        %298 = vmatpush1.msra.mxu0 %v285
        %299 = vmatprep.subr.mxu0 %v288
        %300 = vmatpush1.msra.mxu0 %v287
        %301 = vmatprep.subr.mxu0 %v290
        %302 = vmatpush1.msra.mxu0 %v289
        %303 = vmatprep.subr.mxu0 %v292
        %304 = vmatpush1.msra.mxu0 %v291
        %305 = vmatprep.subr.mxu0 0.0
        %306 = vmatpush1.msra.mxu0 0.0
        %307 = vmatprep.subr.mxu0 0.0
        %308 = vmatpush1.msra.mxu0 0.0
        %309 = vmatprep.subr.mxu0 0.0
        %310 = vmatpush1.msra.mxu0 0.0
        %311 = vmatprep.subr.mxu0 0.0
        %312 = vmatpush1.msra.mxu0 0.0
        %313 = vmatprep.subr.mxu0 0.0
        %314 = vmatpush1.msra.mxu0 0.0
        %315 = vmatprep.subr.mxu0 0.0
        %316 = vmatpush1.msra.mxu0 0.0
        %317 = vmatprep.subr.mxu0 0.0
        %318 = vmatpush1.msra.mxu0 0.0
        %319 = vmatprep.subr.mxu0 0.0
        %320 = vmatpush1.msra.mxu0 0.0
        %321 = vmatprep.subr.mxu0 0.0
        %322 = vmatpush1.msra.mxu0 0.0
        %323 = vmatprep.subr.mxu0 0.0
        %324 = vmatpush1.msra.mxu0 0.0
        %325 = vmatprep.subr.mxu0 0.0
        %326 = vmatpush1.msra.mxu0 0.0
        %327 = vmatprep.subr.mxu0 0.0
        %328 = vmatpush1.msra.mxu0 0.0
        %329 = vmatprep.subr.mxu0 0.0
        %330 = vmatpush1.msra.mxu0 0.0
        %331 = vmatprep.subr.mxu0 0.0
        %332 = vmatpush1.msra.mxu0 0.0
        %333 = vmatprep.subr.mxu0 0.0
        %334 = vmatpush1.msra.mxu0 0.0
        %335 = vmatprep.subr.mxu0 0.0
        %336 = vmatpush1.msra.mxu0 0.0
        %337 = vmatprep.subr.mxu0 0.0
        %338 = vmatpush1.msra.mxu0 0.0
        %339 = vmatprep.subr.mxu0 0.0
        %340 = vmatpush1.msra.mxu0 0.0
        %341 = vmatprep.subr.mxu0 0.0
        %342 = vmatpush1.msra.mxu0 0.0
        %343 = vmatprep.subr.mxu0 0.0
        %344 = vmatpush1.msra.mxu0 0.0
        %345 = vmatprep.subr.mxu0 0.0
        %346 = vmatpush1.msra.mxu0 0.0
        %347 = vmatprep.subr.mxu0 0.0
        %348 = vmatpush1.msra.mxu0 0.0
        %349 = vmatprep.subr.mxu0 0.0
        %350 = vmatpush1.msra.mxu0 0.0
        %351 = vmatprep.subr.mxu0 0.0
        %352 = vmatpush1.msra.mxu0 0.0
        %353 = vmatprep.subr.mxu0 0.0
        %354 = vmatpush1.msra.mxu0 0.0
        %355 = vmatprep.subr.mxu0 0.0
        %356 = vmatpush1.msra.mxu0 0.0
        %357 = vmatprep.subr.mxu0 0.0
        %358 = vmatpush1.msra.mxu0 0.0
        %359 = vmatprep.subr.mxu0 0.0
        %360 = vmatpush1.msra.mxu0 0.0
        %361 = vmatprep.mubr.f32.mxu0 0.0
        %362 = vmatmul.mubr.f32.gmra.mrb[0].mxu0 %v295
        %v363 = vpop.f32.mrb[0].mxu0
        %v364 = vadd.f32 0.0, %v363
        %v365 = vpop.f32.mrb[0].mxu0
        %v366 = vadd.f32 0.0, %v365
        %367 = vdwg.mxu0
        %v368 = vld [vmem:[%s2] sm:$0x1]
        %v370 = vlaneseq
        %v371 = vshrl.u32 %v370, 7
        %v372 = vsub.s32 0, %v371
        %v373 = vrot.slane %v368, %v372
        %v375 = vadd.f32 %v366, %v373
        %v376 = vlaneseq
        %v377 = vand.u32 %v376, 127
        %vm378 = vcmp.lt.s32.totalorder %v377, 4
        %vm379 = vcmp.eq.s32.totalorder %v377, 4
        %v380 = vsel %vm378, %v375, -1e+30
        %381 = vmax.xlane.f32.xlu0 %v380
        %v382 = vpop.xlane.xlu0 %381
        %v383 = vsub.f32 %v380, %v382
        %v384 = vmul.f32 %v383, 1.442695
        %v385 = vpow.pop %v384
        %386 = vadd.xlane.f32.xlu0 %v385
        %v387 = vpop.xlane.xlu0 %386
        %v388 = vsel %vm379, %v375, 0.0
        %389 = vadd.xlane.f32.xlu0 %v388
        %v390 = vpop.xlane.xlu0 %389
        %v391 = vsub.f32 0.0, %v390
        %v392 = vmul.f32 %v391, 1.442695
        %v393 = vpow.pop %v392
        %v394 = vadd.f32 %v393, 1.0
        %v395 = vrcp.pop %v394
        %v396 = vmul.f32 0.25, %v395
        %v397 = vmul.f32 %v396, %v387
        %vm398 = vcmp.ge.f32.partialorder %v385, %v397
        %vm399 = vmand %vm398, %vm378
        %v400 = vsub.f32 %v385, %v397
        %v401 = vsel %vm399, %v400, 0.0
        %402 = vadd.xlane.f32.xlu0 %v401
        %v403 = vpop.xlane.xlu0 %402
        %vm404 = vcmp.eq.f32.partialorder %v403, 0.0
        %v405 = vsel %vm404, 1.0, %v403
        %v406 = vrcp.pop %v405
        %v407 = vmul.f32 2.0, %v406
        %v408 = vmul.f32 %v401, %v407
        %v409 = vld [vmem:[#allocation7] sm:$0xff]
        %v410 = vld [vmem:[#allocation7 + $0x8] sm:$0xff]
        %v411 = vld [vmem:[#allocation7 + $0x10] sm:$0xff]
        %v412 = vld [vmem:[#allocation7 + $0x18] sm:$0xff]
        %v413 = vld [vmem:[#allocation7 + $0x20] sm:$0xff]
        %v414 = vld [vmem:[#allocation7 + $0x28] sm:$0xff]
        %v415 = vld [vmem:[#allocation7 + $0x30] sm:$0xff]
        %v416 = vld [vmem:[#allocation7 + $0x38] sm:$0xff]
        %v417 = vld [vmem:[#allocation7 + $0x40] sm:$0xff]
        %v418 = vld [vmem:[#allocation7 + $0x48] sm:$0xff]
        %v419 = vld [vmem:[#allocation7 + $0x50] sm:$0xff]
        %v420 = vld [vmem:[#allocation7 + $0x58] sm:$0xff]
        %v421 = vld [vmem:[#allocation7 + $0x60] sm:$0xff]
        %v422 = vld [vmem:[#allocation7 + $0x68] sm:$0xff]
        %v423 = vld [vmem:[#allocation7 + $0x70] sm:$0xff]
        %v424 = vld [vmem:[#allocation7 + $0x78] sm:$0xff]
        %425 = vmatprep.subr.mxu0 0.0
        %426 = vmatpush1.msra.mxu0 %v409
        %427 = vmatprep.subr.mxu0 0.0
        %428 = vmatpush1.msra.mxu0 %v410
        %429 = vmatprep.subr.mxu0 0.0
        %430 = vmatpush1.msra.mxu0 %v411
        %431 = vmatprep.subr.mxu0 0.0
        %432 = vmatpush1.msra.mxu0 %v412
        %433 = vmatprep.subr.mxu0 0.0
        %434 = vmatpush1.msra.mxu0 %v413
        %435 = vmatprep.subr.mxu0 0.0
        %436 = vmatpush1.msra.mxu0 %v414
        %437 = vmatprep.subr.mxu0 0.0
        %438 = vmatpush1.msra.mxu0 %v415
        %439 = vmatprep.subr.mxu0 0.0
        %440 = vmatpush1.msra.mxu0 %v416
        %441 = vmatprep.subr.mxu0 0.0
        %442 = vmatpush1.msra.mxu0 %v417
        %443 = vmatprep.subr.mxu0 0.0
        %444 = vmatpush1.msra.mxu0 %v418
        %445 = vmatprep.subr.mxu0 0.0
        %446 = vmatpush1.msra.mxu0 %v419
        %447 = vmatprep.subr.mxu0 0.0
        %448 = vmatpush1.msra.mxu0 %v420
        %449 = vmatprep.subr.mxu0 0.0
        %450 = vmatpush1.msra.mxu0 %v421
        %451 = vmatprep.subr.mxu0 0.0
        %452 = vmatpush1.msra.mxu0 %v422
        %453 = vmatprep.subr.mxu0 0.0
        %454 = vmatpush1.msra.mxu0 %v423
        %455 = vmatprep.subr.mxu0 0.0
        %456 = vmatpush1.msra.mxu0 %v424
        %457 = vmatprep.subr.mxu0 0.0
        %458 = vmatpush1.msra.mxu0 0.0
        %459 = vmatprep.subr.mxu0 0.0
        %460 = vmatpush1.msra.mxu0 0.0
        %461 = vmatprep.subr.mxu0 0.0
        %462 = vmatpush1.msra.mxu0 0.0
        %463 = vmatprep.subr.mxu0 0.0
        %464 = vmatpush1.msra.mxu0 0.0
        %465 = vmatprep.subr.mxu0 0.0
        %466 = vmatpush1.msra.mxu0 0.0
        %467 = vmatprep.subr.mxu0 0.0
        %468 = vmatpush1.msra.mxu0 0.0
        %469 = vmatprep.subr.mxu0 0.0
        %470 = vmatpush1.msra.mxu0 0.0
        %471 = vmatprep.subr.mxu0 0.0
        %472 = vmatpush1.msra.mxu0 0.0
        %473 = vmatprep.subr.mxu0 0.0
        %474 = vmatpush1.msra.mxu0 0.0
        %475 = vmatprep.subr.mxu0 0.0
        %476 = vmatpush1.msra.mxu0 0.0
        %477 = vmatprep.subr.mxu0 0.0
        %478 = vmatpush1.msra.mxu0 0.0
        %479 = vmatprep.subr.mxu0 0.0
        %480 = vmatpush1.msra.mxu0 0.0
        %481 = vmatprep.subr.mxu0 0.0
        %482 = vmatpush1.msra.mxu0 0.0
        %483 = vmatprep.subr.mxu0 0.0
        %484 = vmatpush1.msra.mxu0 0.0
        %485 = vmatprep.subr.mxu0 0.0
        %486 = vmatpush1.msra.mxu0 0.0
        %487 = vmatprep.subr.mxu0 0.0
        %488 = vmatpush1.msra.mxu0 0.0
        %489 = vmatprep.mubr.f32.mxu0 0.0
        %490 = vmatmul.mubr.f32.gmra.mrb[0].mxu0 %v408
        %v491 = vpop.f32.mrb[0].mxu0
        %v492 = vadd.f32 0.0, %v491
        %v493 = vpop.f32.mrb[0].mxu0
        %494 = vdwg.mxu0
        %v495 = vmul.f32 %v364, %v492
        %v496 = vld [vmem:[#allocation8] sm:$0xff]
        %v497 = vld [vmem:[#allocation8 + $0x8] sm:$0xff]
        %v498 = vld [vmem:[#allocation8 + $0x10] sm:$0xff]
        %v499 = vld [vmem:[#allocation8 + $0x18] sm:$0xff]
        %v500 = vld [vmem:[#allocation8 + $0x20] sm:$0xff]
        %v501 = vld [vmem:[#allocation8 + $0x28] sm:$0xff]
        %v502 = vld [vmem:[#allocation8 + $0x30] sm:$0xff]
        %v503 = vld [vmem:[#allocation8 + $0x38] sm:$0xff]
        %v504 = vld [vmem:[#allocation8 + $0x40] sm:$0xff]
        %v505 = vld [vmem:[#allocation8 + $0x48] sm:$0xff]
        %v506 = vld [vmem:[#allocation8 + $0x50] sm:$0xff]
        %v507 = vld [vmem:[#allocation8 + $0x58] sm:$0xff]
        %v508 = vld [vmem:[#allocation8 + $0x60] sm:$0xff]
        %v509 = vld [vmem:[#allocation8 + $0x68] sm:$0xff]
        %v510 = vld [vmem:[#allocation8 + $0x70] sm:$0xff]
        %v511 = vld [vmem:[#allocation8 + $0x78] sm:$0xff]
        %512 = vmatprep.subr.mxu0 0.0
        %513 = vmatpush1.msra.mxu0 %v496
        %514 = vmatprep.subr.mxu0 0.0
        %515 = vmatpush1.msra.mxu0 %v497
        %516 = vmatprep.subr.mxu0 0.0
        %517 = vmatpush1.msra.mxu0 %v498
        %518 = vmatprep.subr.mxu0 0.0
        %519 = vmatpush1.msra.mxu0 %v499
        %520 = vmatprep.subr.mxu0 0.0
        %521 = vmatpush1.msra.mxu0 %v500
        %522 = vmatprep.subr.mxu0 0.0
        %523 = vmatpush1.msra.mxu0 %v501
        %524 = vmatprep.subr.mxu0 0.0
        %525 = vmatpush1.msra.mxu0 %v502
        %526 = vmatprep.subr.mxu0 0.0
        %527 = vmatpush1.msra.mxu0 %v503
        %528 = vmatprep.subr.mxu0 0.0
        %529 = vmatpush1.msra.mxu0 %v504
        %530 = vmatprep.subr.mxu0 0.0
        %531 = vmatpush1.msra.mxu0 %v505
        %532 = vmatprep.subr.mxu0 0.0
        %533 = vmatpush1.msra.mxu0 %v506
        %534 = vmatprep.subr.mxu0 0.0
        %535 = vmatpush1.msra.mxu0 %v507
        %536 = vmatprep.subr.mxu0 0.0
        %537 = vmatpush1.msra.mxu0 %v508
        %538 = vmatprep.subr.mxu0 0.0
        %539 = vmatpush1.msra.mxu0 %v509
        %540 = vmatprep.subr.mxu0 0.0
        %541 = vmatpush1.msra.mxu0 %v510
        %542 = vmatprep.subr.mxu0 0.0
        %543 = vmatpush1.msra.mxu0 %v511
        %544 = vmatprep.subr.mxu0 0.0
        %545 = vmatpush1.msra.mxu0 0.0
        %546 = vmatprep.subr.mxu0 0.0
        %547 = vmatpush1.msra.mxu0 0.0
        %548 = vmatprep.subr.mxu0 0.0
        %549 = vmatpush1.msra.mxu0 0.0
        %550 = vmatprep.subr.mxu0 0.0
        %551 = vmatpush1.msra.mxu0 0.0
        %552 = vmatprep.subr.mxu0 0.0
        %553 = vmatpush1.msra.mxu0 0.0
        %554 = vmatprep.subr.mxu0 0.0
        %555 = vmatpush1.msra.mxu0 0.0
        %556 = vmatprep.subr.mxu0 0.0
        %557 = vmatpush1.msra.mxu0 0.0
        %558 = vmatprep.subr.mxu0 0.0
        %559 = vmatpush1.msra.mxu0 0.0
        %560 = vmatprep.subr.mxu0 0.0
        %561 = vmatpush1.msra.mxu0 0.0
        %562 = vmatprep.subr.mxu0 0.0
        %563 = vmatpush1.msra.mxu0 0.0
        %564 = vmatprep.subr.mxu0 0.0
        %565 = vmatpush1.msra.mxu0 0.0
        %566 = vmatprep.subr.mxu0 0.0
        %567 = vmatpush1.msra.mxu0 0.0
        %568 = vmatprep.subr.mxu0 0.0
        %569 = vmatpush1.msra.mxu0 0.0
        %570 = vmatprep.subr.mxu0 0.0
        %571 = vmatpush1.msra.mxu0 0.0
        %572 = vmatprep.subr.mxu0 0.0
        %573 = vmatpush1.msra.mxu0 0.0
        %574 = vmatprep.subr.mxu0 0.0
        %575 = vmatpush1.msra.mxu0 0.0
        %576 = vmatprep.mubr.f32.mxu0 0.0
        %577 = vmatmul.mubr.f32.gmra.mrb[0].mxu0 %v495
        %v578 = vpop.f32.mrb[0].mxu0
        %v579 = vadd.f32 0.0, %v578
        %v580 = vpop.f32.mrb[0].mxu0
        %581 = vdwg.mxu0
        %582 = vst [vmem:[%s283] sm:$0xff] %v579
        %s583 = sand.u32 %s142, 1
        %s584 = scalar_lea.sflag [#allocation4], %s583
        %s585 = sand.u32 %s142, 1
        %s586 = smul.addr %s585, 8
        %s587 = scalar_lea.vmem [#allocation10], %s586
        // Predicated region
        $region57: #{tpu_custom_call.1} parent=39 // pred_check
          %p588 = pneg %p152
        $region58: #{tpu_custom_call.1} parent=39 // pred_check_branch
          %590 = sbr.rel (%p588) target = $region60
        $region59: #{tpu_custom_call.1} parent=39 // pred_region
          %s592 = ssub.s32 128, 128
          %593 = vsyncadd %s584, %s592
          %s594 = smul.addr %s24, 128
          %s595 = scalar_lea.hbm %s5, %s594
          %s597 = sshll.u32 %s587, 4
          %s598 = int_to_ptr.vmem [resolvable:$true] %s597
          %600 = dma.vmem_to_hbm [thread:$0]  %s598, 128, %s595, %s584
        $region60: #{tpu_custom_call.1} parent=39 // pred_fallthru
          _
      $region40: #{tpu_custom_call.1} parent=5 // pred_fallthru
        _
      %p601 = scmp.le.s32.totalorder 2, %s19
      // Predicated region
      $region61: #{tpu_custom_call.1} parent=5 // pred_check
        %p602 = pneg %p601
      $region62: #{tpu_custom_call.1} parent=5 // pred_check_branch
        %604 = sbr.rel (%p602) target = $region64
      $region63: #{tpu_custom_call.1} parent=5 // pred_region
        %s605 = ssub.s32 %s19, 2
        // Predicated region
        $region65: #{tpu_custom_call.1} parent=63 // pred_check
          %p606 = pneg %p158
        $region66: #{tpu_custom_call.1} parent=63 // pred_check_branch
          %608 = sbr.rel (%p606) target = $region68
        $region67: #{tpu_custom_call.1} parent=63 // pred_region
          %s609 = sand.u32 %s143, 1
          %s610 = scalar_lea.sflag [#allocation4], %s609
          %s611 = sand.u32 %s143, 1
          %s612 = smul.addr %s611, 8
          %s613 = scalar_lea.vmem [#allocation10], %s612
          %614 = dma.done %s610, 128
        $region68: #{tpu_custom_call.1} parent=63 // pred_fallthru
          _
      $region64: #{tpu_custom_call.1} parent=5 // pred_fallthru
        _
    $region6: #{tpu_custom_call.1} parent=1 // loop_footer
      %s23 = sadd.s32 1, %s19
    $region7: #{tpu_custom_call.1} parent=1 // loop_footer_branch
      %18 = sbr.rel target = $region3
    $region8: #{tpu_custom_call.1} parent=1 // loop_exit
      _
    %615 = vsyncpa [#allocation3], 1
    %s616 = scalar_lea.sflag [#allocation3], 1
    %617 = vsyncpa %s616, 1
    %618 = vsyncpa [#allocation6], 1
    %619 = vsyncpa [#allocation9], 1
    %620 = vsyncpa [#allocation4], 1
    %s621 = scalar_lea.sflag [#allocation4], 1
    %622 = vsyncpa %s621, 1

</llo_original>
